<compile_context>
chip_gen: v5e
topology: v5e:2x2
jax: 0.10.0
libtpu: 0.0.40
codegen_flags: <defaults>
</compile_context>

<pallas_src>
import functools

import jax
import jax.numpy as jnp
from jax.experimental import pallas as pl
from jax.experimental.pallas import tpu as pltpu


def _round_up(x, m):
    return ((x + m - 1) // m) * m


def _choose_tile(dim, candidates, max_waste=0.13):
    """Pick a tile first, then pad `dim` up to a multiple of it.

    Prefers the largest candidate whose padding waste is <= max_waste; otherwise
    the candidate with minimal padded size (larger tile wins ties).
    Returns (tile, padded_dim).
    """
    options = [(t, _round_up(dim, t)) for t in candidates]  # candidates descending
    for t, p in options:
        if (p - dim) / p <= max_waste:
            return t, p
    return min(options, key=lambda tp: (tp[1], -tp[0]))


def _vmem_cap_bytes():
    try:
        return int(pltpu.get_tpu_info().vmem_capacity_bytes)
    except Exception:
        return 64 << 20  # conservative (v7x physical VMEM)


# ----------------------------- Pallas kernel --------------------------------
def _polyconv_gemm_kernel(w_ref, p_ref, bias_ref, o_ref, acc_ref):
    """Grid point (oi, mi, ki) of  O = ReLU( W_scaled @ P + bias ).

    w_ref    : (TOC, TK)  bf16, BN scale folded into weight rows
    p_ref    : (TK, TM)   bf16, im2col^T patches block (batch folded into M)
    bias_ref : (TOC, 1)   f32 folded BN bias
    o_ref    : (TOC, TM)  bf16 output tile (lane-dense along M)
    acc_ref  : (TOC, TM)  f32 scratch accumulator (lives across K steps)
    """
    k = pl.program_id(2)

    @pl.when(k == 0)
    def _():
        acc_ref[...] = jnp.zeros_like(acc_ref)

    acc_ref[...] += jnp.dot(w_ref[...], p_ref[...],
                            preferred_element_type=jnp.float32)

    @pl.when(k == pl.num_programs(2) - 1)
    def _():
        y = acc_ref[...] + bias_ref[...]          # lane-broadcast of (TOC, 1)
        o_ref[...] = jnp.maximum(y, 0.0).astype(o_ref.dtype)


# ------------------------------- Wrapper -------------------------------------
def _im2col_kt(x, kernel_size, stride, padding):
    """x: (N, C, H, W) -> patches (C*KH*KW, N*OH*OW) in x.dtype, plus (OH, OW).

    K ordering is (C, KH, KW), matching conv_w.reshape(OC, C*KH*KW).
    The batch dimension is folded into the M (lane) axis: M = N*OH*OW.
    """
    kh, kw = kernel_size
    sh, sw = stride
    ph, pw = padding
    n, c, h, w = x.shape
    oh = (h + 2 * ph - kh) // sh + 1
    ow = (w + 2 * pw - kw) // sw + 1
    xp = jnp.pad(x, ((0, 0), (0, 0), (ph, ph), (pw, pw)))
    cols = []
    for ih in range(kh):
        for iw in range(kw):
            cols.append(xp[:, :, ih:ih + sh * oh:sh, iw:iw + sw * ow:sw])  # (N,C,OH,OW)
    patches = jnp.stack(cols, axis=2)                   # (N, C, KH*KW, OH, OW)
    patches = patches.transpose(1, 2, 0, 3, 4)          # (C, KH*KW, N, OH, OW)
    patches = patches.reshape(c * kh * kw, n * oh * ow)  # (K, N*M)
    return patches, oh, ow


@functools.partial(jax.jit, static_argnames=("kernel_size", "stride", "padding", "index"))
def polyconv_forward(x, conv_w, bn_gammas, bn_betas, bn_means, bn_vars,
                     *, kernel_size, stride, padding, index, eps=1e-5):
    """PolyConv forward.  x: (N, C, H, W) float32, conv_w: (OC, C, KH, KW)."""
    n, c, h, w = x.shape
    oc = conv_w.shape[0]
    kh, kw = kernel_size
    k = c * kh * kw

    # im2col^T in bf16 (2 B/elem intermediate), batch folded into lanes.
    patches, oh, ow = _im2col_kt(x.astype(jnp.bfloat16), kernel_size, stride, padding)
    m_total = n * oh * ow

    # Fold the index-selected inference-mode BatchNorm into weights + bias.
    gamma = bn_gammas[index].astype(jnp.float32)
    beta = bn_betas[index].astype(jnp.float32)
    mean = bn_means[index].astype(jnp.float32)
    var = bn_vars[index].astype(jnp.float32)
    scale = gamma * jax.lax.rsqrt(var + eps)                       # (OC,)
    w_mat = conv_w.reshape(oc, k).astype(jnp.float32) * scale[:, None]   # (OC, K)
    bias = (beta - mean * scale)[:, None]                          # (OC, 1)

    # Tile-first sizing: pick MXU-friendly tiles, then pad dims to multiples.
    if oc <= 128:
        toc = _round_up(oc, 16)          # small-OC last resort: full OC, bf16-aligned
        ocp = toc
    else:
        toc, ocp = _choose_tile(oc, (512, 256, 128))
    tk, kp = _choose_tile(k, (512, 256, 128))
    tm, mp = _choose_tile(m_total, (2048, 1024, 512, 256, 128))

    w_pad = jnp.pad(w_mat, ((0, ocp - oc), (0, kp - k))).astype(jnp.bfloat16)
    p_pad = jnp.pad(patches, ((0, kp - k), (0, mp - m_total)))     # already bf16
    b_pad = jnp.pad(bias, ((0, ocp - oc), (0, 0))).astype(jnp.float32)

    grid = (ocp // toc, mp // tm, kp // tk)

    # VMEM budget: double-buffered inputs/outputs + f32 accumulator, headroom,
    # capped well under physical VMEM (64 MiB on v7x).
    vmem_need = (2 * toc * tk * 2        # weights, bf16, double-buffered
                 + 2 * tk * tm * 2       # patches, bf16, double-buffered
                 + 2 * toc * tm * 2      # output, bf16, double-buffered
                 + toc * tm * 4          # f32 accumulator
                 + 2 * toc * 4)          # bias
    hard_cap = min(40 << 20, (_vmem_cap_bytes() * 5) // 8)
    vmem_limit = int(min(max(int(1.5 * vmem_need), 4 << 20), hard_cap))
    vmem_limit = int(max(vmem_limit, vmem_need + (2 << 20)))

    cost = pl.CostEstimate(
        flops=2 * ocp * mp * kp,
        transcendentals=0,
        bytes_accessed=(kp * mp * 2 * (ocp // toc)     # patches re-read per OC tile
                        + ocp * kp * 2 * (mp // tm)    # weights re-read per M tile
                        + ocp * mp * 2                 # bf16 output writeback
                        + ocp * 4))                    # bias

    out_pad = pl.pallas_call(
        _polyconv_gemm_kernel,
        out_shape=jax.ShapeDtypeStruct((ocp, mp), jnp.bfloat16),
        grid_spec=pltpu.PrefetchScalarGridSpec(
            num_scalar_prefetch=0,
            grid=grid,
            in_specs=[
                # BN-scaled weights (OCp, Kp)
                pl.BlockSpec((toc, tk), lambda oi, mi, ki: (oi, ki)),
                # im2col^T patches (Kp, N*Mp)
                # TODO(synk): on v5e add pipeline_mode=pl.Buffered(3) here if
                #             xprof still shows exposed patch DMA.
                pl.BlockSpec((tk, tm), lambda oi, mi, ki: (ki, mi)),
                # folded BN bias (OCp, 1)
                pl.BlockSpec((toc, 1), lambda oi, mi, ki: (oi, 0)),
            ],
            out_specs=pl.BlockSpec((toc, tm), lambda oi, mi, ki: (oi, mi)),
            scratch_shapes=[pltpu.VMEM((toc, tm), jnp.float32)],
        ),
        compiler_params=pltpu.CompilerParams(
            dimension_semantics=("parallel", "parallel", "arbitrary"),
            vmem_limit_bytes=vmem_limit),
        cost_estimate=cost,
    )(w_pad, p_pad, b_pad)

    # (OCp, N*Mp) -> strip padding -> (OC, N, OH, OW) -> NCHW; cast back to x.dtype
    # during the layout op (fused by XLA with the transpose).
    out = out_pad[:oc, :m_total].reshape(oc, n, oh, ow)
    out = jnp.transpose(out, (1, 0, 2, 3)).astype(x.dtype)
    return out


# ------------------------------- Reference -----------------------------------
def polyconv_reference(x, conv_w, bn_gammas, bn_betas, bn_means, bn_vars,
                       *, stride, padding, index, eps=1e-5):
    y = jax.lax.conv_general_dilated(
        x, conv_w, window_strides=stride,
        padding=[(padding[0], padding[0]), (padding[1], padding[1])],
        dimension_numbers=("NCHW", "OIHW", "NCHW"))
    gamma = bn_gammas[index].reshape(1, -1, 1, 1)
    beta = bn_betas[index].reshape(1, -1, 1, 1)
    mean = bn_means[index].reshape(1, -1, 1, 1)
    var = bn_vars[index].reshape(1, -1, 1, 1)
    y = (y - mean) / jnp.sqrt(var + eps) * gamma + beta
    return jnp.maximum(y, 0.0)


# --------------------------------- Main ---------------------------------------
if __name__ == "__main__":
    # Module hyper-parameters (small, consistent with PolyConv usage).
    in_channels = 4
    out_channels = 8
    kernel_size = (3, 3)
    stride = (1, 1)
    padding = (1, 1)
    num_blocks = 3
    index = 1

    key = jax.random.PRNGKey(0)
    k_x, k_w, k_g, k_b, k_m, k_v = jax.random.split(key, 6)

    # Deterministic parameter init (synthetic; shapes from nn.Conv2d / BatchNorm2d).
    x = jax.random.normal(k_x, (2, in_channels, 16, 16), dtype=jnp.float32)
    conv_w = 0.1 * jax.random.normal(
        k_w, (out_channels, in_channels, kernel_size[0], kernel_size[1]),
        dtype=jnp.float32)
    bn_gammas = 1.0 + 0.1 * jax.random.normal(k_g, (num_blocks, out_channels), jnp.float32)
    bn_betas = 0.1 * jax.random.normal(k_b, (num_blocks, out_channels), jnp.float32)
    bn_means = 0.1 * jax.random.normal(k_m, (num_blocks, out_channels), jnp.float32)
    bn_vars = 0.5 + jnp.abs(jax.random.normal(k_v, (num_blocks, out_channels), jnp.float32))

    out = polyconv_forward(
        x, conv_w, bn_gammas, bn_betas, bn_means, bn_vars,
        kernel_size=kernel_size, stride=stride, padding=padding, index=index)
    out = jax.block_until_ready(out)

    ref = polyconv_reference(
        x, conv_w, bn_gammas, bn_betas, bn_means, bn_vars,
        stride=stride, padding=padding, index=index)
    ref = jax.block_until_ready(ref)

    assert out.shape == (2, out_channels, 16, 16), out.shape
    # bf16 operands + bf16 output with f32 accumulation -> relaxed tolerance.
    max_err = float(jnp.max(jnp.abs(out - ref)))
    assert jnp.allclose(out, ref, atol=3e-2, rtol=3e-2), max_err

    print("KERNEL_OK")
</pallas_src>

<mosaic_0001>
module attributes {stable_mosaic.version = 11 : i64} {
  func.func @_polyconv_gemm_kernel(%arg0: i32, %arg1: i32, %arg2: i32, %arg3: memref<16x128xbf16, #tpu.memory_space<vmem>>, %arg4: memref<128x512xbf16, #tpu.memory_space<vmem>>, %arg5: memref<16x1xf32, #tpu.memory_space<vmem>>, %arg6: memref<16x512xbf16, #tpu.memory_space<vmem>>, %arg7: memref<16x512xf32, #tpu.memory_space<vmem>>) attributes {dimension_semantics = [#tpu.dimension_semantics<parallel>, #tpu.dimension_semantics<parallel>, #tpu.dimension_semantics<arbitrary>], iteration_bounds = array<i64: 1, 1, 1>, scalar_prefetch = 0 : i64, scratch_operands = 1 : i64, tpu.core_type = #tpu.core_type<tc>, window_params = [{transform_indices = @transform_0, window_bounds = array<i64: 16, 128>}, {transform_indices = @transform_1, window_bounds = array<i64: 128, 512>}, {transform_indices = @transform_2, window_bounds = array<i64: 16, 1>}, {transform_indices = @transform_3, window_bounds = array<i64: 16, 512>}]} {
    %c0_i32 = arith.constant 0 : i32
    %0 = arith.cmpi eq, %arg2, %c0_i32 : i32
    %1 = arith.extui %0 : i1 to i32
    %c0_i32_0 = arith.constant 0 : i32
    %2 = arith.cmpi ne, %1, %c0_i32_0 : i32
    scf.if %2 {
      %cst_10 = arith.constant 0.000000e+00 : f32
      %12 = vector.broadcast %cst_10 : f32 to vector<16x512xf32>
      %c0_11 = arith.constant 0 : index
      %c0_12 = arith.constant 0 : index
      %13 = vector.load %arg7[%c0_11, %c0_12] : memref<16x512xf32, #tpu.memory_space<vmem>>, vector<16x512xf32>
      tpu.vector_store %arg7[%c0_11, %c0_12], %12 {strides = array<i32>} : memref<16x512xf32, #tpu.memory_space<vmem>>, vector<16x512xf32>,
    } else {
    }
    %c0 = arith.constant 0 : index
    %c0_1 = arith.constant 0 : index
    %3 = vector.load %arg7[%c0, %c0_1] : memref<16x512xf32, #tpu.memory_space<vmem>>, vector<16x512xf32>
    %c0_2 = arith.constant 0 : index
    %c0_3 = arith.constant 0 : index
    %4 = vector.load %arg3[%c0_2, %c0_3] : memref<16x128xbf16, #tpu.memory_space<vmem>>, vector<16x128xbf16>
    %c0_4 = arith.constant 0 : index
    %c0_5 = arith.constant 0 : index
    %5 = vector.load %arg4[%c0_4, %c0_5] : memref<128x512xbf16, #tpu.memory_space<vmem>>, vector<128x512xbf16>
    %cst = arith.constant dense<0.000000e+00> : vector<16x512xf32>
    %6 = tpu.matmul %4, %5, %cst {dimension_numbers = #tpu.dot_dimension_numbers<[1], [0], [0], [1], [0, 0, 1, 1], [], []>} : vector<16x128xbf16>, vector<128x512xbf16>, vector<16x512xf32> -> vector<16x512xf32>
    %7 = arith.addf %3, %6 : vector<16x512xf32>
    %c0_6 = arith.constant 0 : index
    %c0_7 = arith.constant 0 : index
    %8 = vector.load %arg7[%c0_6, %c0_7] : memref<16x512xf32, #tpu.memory_space<vmem>>, vector<16x512xf32>
    tpu.vector_store %arg7[%c0_6, %c0_7], %7 {strides = array<i32>} : memref<16x512xf32, #tpu.memory_space<vmem>>, vector<16x512xf32>,
    %c0_i32_8 = arith.constant 0 : i32
    %9 = arith.cmpi eq, %arg2, %c0_i32_8 : i32
    %10 = arith.extui %9 : i1 to i32
    %c0_i32_9 = arith.constant 0 : i32
    %11 = arith.cmpi ne, %10, %c0_i32_9 : i32
    scf.if %11 {
      %c0_10 = arith.constant 0 : index
      %c0_11 = arith.constant 0 : index
      %12 = vector.load %arg7[%c0_10, %c0_11] : memref<16x512xf32, #tpu.memory_space<vmem>>, vector<16x512xf32>
      %c0_12 = arith.constant 0 : index
      %c0_13 = arith.constant 0 : index
      %13 = vector.load %arg5[%c0_12, %c0_13] : memref<16x1xf32, #tpu.memory_space<vmem>>, vector<16x1xf32>
      %14 = vector.broadcast %13 : vector<16x1xf32> to vector<16x512xf32>
      %15 = arith.addf %12, %14 : vector<16x512xf32>
      %cst_14 = arith.constant 0.000000e+00 : f32
      %16 = vector.broadcast %cst_14 : f32 to vector<16x512xf32>
      %17 = arith.maximumf %15, %16 : vector<16x512xf32>
      %18 = arith.truncf %17 : vector<16x512xf32> to vector<16x512xbf16>
      %c0_15 = arith.constant 0 : index
      %c0_16 = arith.constant 0 : index
      %19 = vector.load %arg6[%c0_15, %c0_16] : memref<16x512xbf16, #tpu.memory_space<vmem>>, vector<16x512xbf16>
      tpu.vector_store %arg6[%c0_15, %c0_16], %18 {strides = array<i32>} : memref<16x512xbf16, #tpu.memory_space<vmem>>, vector<16x512xbf16>,
    } else {
    }
    return
  }
  func.func @transform_0(%arg0: i32, %arg1: i32, %arg2: i32) -> (i32, i32) {
    %c0_i32 = arith.constant 0 : i32
    return %arg0, %arg2 : i32, i32
  }
  func.func @transform_1(%arg0: i32, %arg1: i32, %arg2: i32) -> (i32, i32) {
    %c0_i32 = arith.constant 0 : i32
    return %arg2, %arg1 : i32, i32
  }
  func.func @transform_2(%arg0: i32, %arg1: i32, %arg2: i32) -> (i32, i32) {
    %c0_i32 = arith.constant 0 : i32
    %c0_i32_0 = arith.constant 0 : i32
    return %arg0, %c0_i32 : i32, i32
  }
  func.func @transform_3(%arg0: i32, %arg1: i32, %arg2: i32) -> (i32, i32) {
    %c0_i32 = arith.constant 0 : i32
    return %arg0, %arg1 : i32, i32
  }
}

</mosaic_0001>

<llo_original>
// kernel: polyconv_forward.1
$region0: #{polyconv_forward.1}
  #allocation0 [shape = 'u32[]', space=smem, size = 0x4, offset = 0x4, fixed_abs, tag = 'smem constant byte address 0x4 - core index']
  #allocation1 [shape = 'u32[72,128]{1,0:T(1,128)}', space=vmem, size = 0x9000, scoped, tag = 'internal scratch']
  #allocation2 [shape = 'f32[16,512]{1,0:T(8,128)}', space=vmem, size = 0x8000, scoped, tag = 'scratch operand']
  %s0 = inlined_call_operand.vmem [shape: bf16[16,128], index: 0, kind: input, shape index: {}]
  %s1 = inlined_call_operand.vmem [shape: bf16[128,512], index: 1, kind: input, shape index: {}]
  %s2 = inlined_call_operand.vmem [shape: f32[16,1], index: 2, kind: input, shape index: {}]
  %s3 = inlined_call_operand.vmem [shape: bf16[16,512], index: 3, kind: output, shape index: {}]
  %s4 = sld [smem:[#allocation0]]
  $region30: #{polyconv_forward.1} parent=0
    _
  %s6 = ssub.s32 1, %s4
  %s7 = scalar_select 0, %s6, %s4
  // Predicated region
  $region2: #{polyconv_forward.1} parent=0 // pred_check
    _
  $region3: #{polyconv_forward.1} parent=0 // pred_check_branch
    %9 = sbr.rel (0) target = $region5
  $region4: #{polyconv_forward.1} parent=0 // pred_region
    _
  $region5: #{polyconv_forward.1} parent=0 // pred_fallthru
    _
  // Predicated region
  $region6: #{polyconv_forward.1} parent=0 // pred_check
    _
  $region7: #{polyconv_forward.1} parent=0 // pred_check_branch
    %11 = sbr.rel (0) target = $region9
  $region8: #{polyconv_forward.1} parent=0 // pred_region
    _
  $region9: #{polyconv_forward.1} parent=0 // pred_fallthru
    _
  // Predicated region
  $region10: #{polyconv_forward.1} parent=0 // pred_check
    _
  $region11: #{polyconv_forward.1} parent=0 // pred_check_branch
    %13 = sbr.rel (0) target = $region13
  $region12: #{polyconv_forward.1} parent=0 // pred_region
    _
  $region13: #{polyconv_forward.1} parent=0 // pred_fallthru
    _
  %p14 = scmp.eq.s32.totalorder 0, 0
  // Predicated region
  $region14: #{polyconv_forward.1} parent=0 // pred_check
    %p15 = pneg %p14
  $region15: #{polyconv_forward.1} parent=0 // pred_check_branch
    %17 = sbr.rel (%p15) target = $region17
  $region16: #{polyconv_forward.1} parent=0 // pred_region
    %18 = vst [vmem:[#allocation2] sm:$0xff] 0.0
    %19 = vst [vmem:[#allocation2 + $0x8] sm:$0xff] 0.0
    %20 = vst [vmem:[#allocation2 + $0x10] sm:$0xff] 0.0
    %21 = vst [vmem:[#allocation2 + $0x18] sm:$0xff] 0.0
    %22 = vst [vmem:[#allocation2 + $0x20] sm:$0xff] 0.0
    %23 = vst [vmem:[#allocation2 + $0x28] sm:$0xff] 0.0
    %24 = vst [vmem:[#allocation2 + $0x30] sm:$0xff] 0.0
    %25 = vst [vmem:[#allocation2 + $0x38] sm:$0xff] 0.0
  $region17: #{polyconv_forward.1} parent=0 // pred_fallthru
    _
  %v26 = vld [vmem:[#allocation2] sm:$0xff]
  %v27 = vld [vmem:[#allocation2 + $0x8] sm:$0xff]
  %v28 = vld [vmem:[#allocation2 + $0x10] sm:$0xff]
  %v29 = vld [vmem:[#allocation2 + $0x18] sm:$0xff]
  %v30 = vld [vmem:[#allocation2 + $0x20] sm:$0xff]
  %v31 = vld [vmem:[#allocation2 + $0x28] sm:$0xff]
  %v32 = vld [vmem:[#allocation2 + $0x30] sm:$0xff]
  %v33 = vld [vmem:[#allocation2 + $0x38] sm:$0xff]
  %v34 = vld [vmem:[%s0] sm:$0xf]
  %v35 = vld [vmem:[%s0 + $0x4] sm:$0xf]
  %v36 = vld [vmem:[%s1] sm:$0xff]
  %v37 = vld [vmem:[%s1 + $0x8] sm:$0xff]
  %v38 = vld [vmem:[%s1 + $0x10] sm:$0xff]
  %v39 = vld [vmem:[%s1 + $0x18] sm:$0xff]
  %v40 = vld [vmem:[%s1 + $0x20] sm:$0xff]
  %v41 = vld [vmem:[%s1 + $0x28] sm:$0xff]
  %v42 = vld [vmem:[%s1 + $0x30] sm:$0xff]
  %v43 = vld [vmem:[%s1 + $0x38] sm:$0xff]
  %v44 = vld [vmem:[%s1 + $0x40] sm:$0xff]
  %v45 = vld [vmem:[%s1 + $0x48] sm:$0xff]
  %v46 = vld [vmem:[%s1 + $0x50] sm:$0xff]
  %v47 = vld [vmem:[%s1 + $0x58] sm:$0xff]
  %v48 = vld [vmem:[%s1 + $0x60] sm:$0xff]
  %v49 = vld [vmem:[%s1 + $0x68] sm:$0xff]
  %v50 = vld [vmem:[%s1 + $0x70] sm:$0xff]
  %v51 = vld [vmem:[%s1 + $0x78] sm:$0xff]
  %v52 = vld [vmem:[%s1 + $0x80] sm:$0xff]
  %v53 = vld [vmem:[%s1 + $0x88] sm:$0xff]
  %v54 = vld [vmem:[%s1 + $0x90] sm:$0xff]
  %v55 = vld [vmem:[%s1 + $0x98] sm:$0xff]
  %v56 = vld [vmem:[%s1 + $0xa0] sm:$0xff]
  %v57 = vld [vmem:[%s1 + $0xa8] sm:$0xff]
  %v58 = vld [vmem:[%s1 + $0xb0] sm:$0xff]
  %v59 = vld [vmem:[%s1 + $0xb8] sm:$0xff]
  %v60 = vld [vmem:[%s1 + $0xc0] sm:$0xff]
  %v61 = vld [vmem:[%s1 + $0xc8] sm:$0xff]
  %v62 = vld [vmem:[%s1 + $0xd0] sm:$0xff]
  %v63 = vld [vmem:[%s1 + $0xd8] sm:$0xff]
  %v64 = vld [vmem:[%s1 + $0xe0] sm:$0xff]
  %v65 = vld [vmem:[%s1 + $0xe8] sm:$0xff]
  %v66 = vld [vmem:[%s1 + $0xf0] sm:$0xff]
  %v67 = vld [vmem:[%s1 + $0xf8] sm:$0xff]
  %v70 = vunpack.c.l.b16 %v34
  %v71 = vunpack.c.l.b16 %v35
  %v72 = vpack.c.b16 %v71, %v70
  %v106 = vunpack.c.l.b16 %v36
  %v107 = vunpack.c.h.b16 %v36
  %v108 = vunpack.c.l.b16 %v37
  %v109 = vunpack.c.h.b16 %v37
  %v110 = vunpack.c.l.b16 %v38
  %v111 = vunpack.c.h.b16 %v38
  %v112 = vunpack.c.l.b16 %v39
  %v113 = vunpack.c.h.b16 %v39
  %v114 = vunpack.c.l.b16 %v40
  %v115 = vunpack.c.h.b16 %v40
  %v116 = vunpack.c.l.b16 %v41
  %v117 = vunpack.c.h.b16 %v41
  %v118 = vunpack.c.l.b16 %v42
  %v119 = vunpack.c.h.b16 %v42
  %v120 = vunpack.c.l.b16 %v43
  %v121 = vunpack.c.h.b16 %v43
  %v122 = vunpack.c.l.b16 %v44
  %v123 = vunpack.c.h.b16 %v44
  %v124 = vunpack.c.l.b16 %v45
  %v125 = vunpack.c.h.b16 %v45
  %v126 = vunpack.c.l.b16 %v46
  %v127 = vunpack.c.h.b16 %v46
  %v128 = vunpack.c.l.b16 %v47
  %v129 = vunpack.c.h.b16 %v47
  %v130 = vunpack.c.l.b16 %v48
  %v131 = vunpack.c.h.b16 %v48
  %v132 = vunpack.c.l.b16 %v49
  %v133 = vunpack.c.h.b16 %v49
  %v134 = vunpack.c.l.b16 %v50
  %v135 = vunpack.c.h.b16 %v50
  %v136 = vunpack.c.l.b16 %v51
  %v137 = vunpack.c.h.b16 %v51
  %v138 = vunpack.c.l.b16 %v52
  %v139 = vunpack.c.h.b16 %v52
  %v140 = vunpack.c.l.b16 %v53
  %v141 = vunpack.c.h.b16 %v53
  %v142 = vunpack.c.l.b16 %v54
  %v143 = vunpack.c.h.b16 %v54
  %v144 = vunpack.c.l.b16 %v55
  %v145 = vunpack.c.h.b16 %v55
  %v146 = vunpack.c.l.b16 %v56
  %v147 = vunpack.c.h.b16 %v56
  %v148 = vunpack.c.l.b16 %v57
  %v149 = vunpack.c.h.b16 %v57
  %v150 = vunpack.c.l.b16 %v58
  %v151 = vunpack.c.h.b16 %v58
  %v152 = vunpack.c.l.b16 %v59
  %v153 = vunpack.c.h.b16 %v59
  %v154 = vunpack.c.l.b16 %v60
  %v155 = vunpack.c.h.b16 %v60
  %v156 = vunpack.c.l.b16 %v61
  %v157 = vunpack.c.h.b16 %v61
  %v158 = vunpack.c.l.b16 %v62
  %v159 = vunpack.c.h.b16 %v62
  %v160 = vunpack.c.l.b16 %v63
  %v161 = vunpack.c.h.b16 %v63
  %v162 = vunpack.c.l.b16 %v64
  %v163 = vunpack.c.h.b16 %v64
  %v164 = vunpack.c.l.b16 %v65
  %v165 = vunpack.c.h.b16 %v65
  %v166 = vunpack.c.l.b16 %v66
  %v167 = vunpack.c.h.b16 %v66
  %v168 = vunpack.c.l.b16 %v67
  %v169 = vunpack.c.h.b16 %v67
  %v170 = vpack.c.b16 %v110, %v106
  %v171 = vpack.c.b16 %v111, %v107
  %v172 = vpack.c.b16 %v112, %v108
  %v173 = vpack.c.b16 %v113, %v109
  %v174 = vpack.c.b16 %v118, %v114
  %v175 = vpack.c.b16 %v119, %v115
  %v176 = vpack.c.b16 %v120, %v116
  %v177 = vpack.c.b16 %v121, %v117
  %v178 = vpack.c.b16 %v126, %v122
  %v179 = vpack.c.b16 %v127, %v123
  %v180 = vpack.c.b16 %v128, %v124
  %v181 = vpack.c.b16 %v129, %v125
  %v182 = vpack.c.b16 %v134, %v130
  %v183 = vpack.c.b16 %v135, %v131
  %v184 = vpack.c.b16 %v136, %v132
  %v185 = vpack.c.b16 %v137, %v133
  %v186 = vpack.c.b16 %v142, %v138
  %v187 = vpack.c.b16 %v143, %v139
  %v188 = vpack.c.b16 %v144, %v140
  %v189 = vpack.c.b16 %v145, %v141
  %v190 = vpack.c.b16 %v150, %v146
  %v191 = vpack.c.b16 %v151, %v147
  %v192 = vpack.c.b16 %v152, %v148
  %v193 = vpack.c.b16 %v153, %v149
  %v194 = vpack.c.b16 %v158, %v154
  %v195 = vpack.c.b16 %v159, %v155
  %v196 = vpack.c.b16 %v160, %v156
  %v197 = vpack.c.b16 %v161, %v157
  %v198 = vpack.c.b16 %v166, %v162
  %v199 = vpack.c.b16 %v167, %v163
  %v200 = vpack.c.b16 %v168, %v164
  %v201 = vpack.c.b16 %v169, %v165
  %234 = vmatpush.bf16.msra.mxu0 %v198
  %235 = vmatpush.bf16.msra.mxu0 %v194
  %236 = vmatpush.bf16.msra.mxu0 %v190
  %237 = vmatpush.bf16.msra.mxu0 %v186
  %238 = vmatpush.bf16.msra.mxu0 %v182
  %239 = vmatpush.bf16.msra.mxu0 %v178
  %240 = vmatpush.bf16.msra.mxu0 %v174
  %241 = vmatpush.bf16.msra.mxu0 %v170
  %242 = vmatmul.bf16.gmra.mxu0 %v72
  %v243 = vpop.f32.mrf.mxu0
  %v244 = vadd.f32 0.0, %v243
  %v245 = vpop.f32.mrf.mxu0
  %v246 = vadd.f32 0.0, %v245
  %247 = vdwg.mxu0
  %248 = vmatpush.bf16.msra.mxu0 %v199
  %249 = vmatpush.bf16.msra.mxu0 %v195
  %250 = vmatpush.bf16.msra.mxu0 %v191
  %251 = vmatpush.bf16.msra.mxu0 %v187
  %252 = vmatpush.bf16.msra.mxu0 %v183
  %253 = vmatpush.bf16.msra.mxu0 %v179
  %254 = vmatpush.bf16.msra.mxu0 %v175
  %255 = vmatpush.bf16.msra.mxu0 %v171
  %256 = vmatmul.bf16.gmra.mxu0 %v72
  %v257 = vpop.f32.mrf.mxu0
  %v258 = vadd.f32 0.0, %v257
  %v259 = vpop.f32.mrf.mxu0
  %v260 = vadd.f32 0.0, %v259
  %261 = vdwg.mxu0
  %262 = vmatpush.bf16.msra.mxu0 %v200
  %263 = vmatpush.bf16.msra.mxu0 %v196
  %264 = vmatpush.bf16.msra.mxu0 %v192
  %265 = vmatpush.bf16.msra.mxu0 %v188
  %266 = vmatpush.bf16.msra.mxu0 %v184
  %267 = vmatpush.bf16.msra.mxu0 %v180
  %268 = vmatpush.bf16.msra.mxu0 %v176
  %269 = vmatpush.bf16.msra.mxu0 %v172
  %270 = vmatmul.bf16.gmra.mxu0 %v72
  %v271 = vpop.f32.mrf.mxu0
  %v272 = vadd.f32 0.0, %v271
  %v273 = vpop.f32.mrf.mxu0
  %v274 = vadd.f32 0.0, %v273
  %275 = vdwg.mxu0
  %276 = vmatpush.bf16.msra.mxu0 %v201
  %277 = vmatpush.bf16.msra.mxu0 %v197
  %278 = vmatpush.bf16.msra.mxu0 %v193
  %279 = vmatpush.bf16.msra.mxu0 %v189
  %280 = vmatpush.bf16.msra.mxu0 %v185
  %281 = vmatpush.bf16.msra.mxu0 %v181
  %282 = vmatpush.bf16.msra.mxu0 %v177
  %283 = vmatpush.bf16.msra.mxu0 %v173
  %284 = vmatmul.bf16.gmra.mxu0 %v72
  %v285 = vpop.f32.mrf.mxu0
  %v286 = vadd.f32 0.0, %v285
  %v287 = vpop.f32.mrf.mxu0
  %v288 = vadd.f32 0.0, %v287
  %289 = vdwg.mxu0
  %v290 = vadd.f32 %v26, %v244
  %v291 = vadd.f32 %v27, %v258
  %v292 = vadd.f32 %v28, %v272
  %v293 = vadd.f32 %v29, %v286
  %v294 = vadd.f32 %v30, %v246
  %v295 = vadd.f32 %v31, %v260
  %v296 = vadd.f32 %v32, %v274
  %v297 = vadd.f32 %v33, %v288
  %298 = vst [vmem:[#allocation2] sm:$0xff] %v290
  %299 = vst [vmem:[#allocation2 + $0x8] sm:$0xff] %v291
  %300 = vst [vmem:[#allocation2 + $0x10] sm:$0xff] %v292
  %301 = vst [vmem:[#allocation2 + $0x18] sm:$0xff] %v293
  %302 = vst [vmem:[#allocation2 + $0x20] sm:$0xff] %v294
  %303 = vst [vmem:[#allocation2 + $0x28] sm:$0xff] %v295
  %304 = vst [vmem:[#allocation2 + $0x30] sm:$0xff] %v296
  %305 = vst [vmem:[#allocation2 + $0x38] sm:$0xff] %v297
  // Predicated region
  $region18: #{polyconv_forward.1} parent=0 // pred_check
    %p306 = pneg %p14
  $region19: #{polyconv_forward.1} parent=0 // pred_check_branch
    %308 = sbr.rel (%p306) target = $region21
  $region20: #{polyconv_forward.1} parent=0 // pred_region
    %v309 = vld [vmem:[#allocation2] sm:$0xff]
    %v310 = vld [vmem:[#allocation2 + $0x8] sm:$0xff]
    %v311 = vld [vmem:[#allocation2 + $0x10] sm:$0xff]
    %v312 = vld [vmem:[#allocation2 + $0x18] sm:$0xff]
    %v313 = vld [vmem:[#allocation2 + $0x20] sm:$0xff]
    %v314 = vld [vmem:[#allocation2 + $0x28] sm:$0xff]
    %v315 = vld [vmem:[#allocation2 + $0x30] sm:$0xff]
    %v316 = vld [vmem:[#allocation2 + $0x38] sm:$0xff]
    %v317 = vld [vmem:[%s2] sm:$0xff]
    %v318 = vld [vmem:[%s2 + $0x8] sm:$0xff]
    %320 = vset.pattern.permute.xlu0 0
    %321 = vperm.xlu0 %320, %v317
    %v322 = vpop.permute.xlu0 %321
    %325 = vset.pattern.permute.xlu0 0
    %326 = vperm.xlu0 %325, %v318
    %v327 = vpop.permute.xlu0 %326
    %v329 = vadd.f32 %v309, %v322
    %v330 = vadd.f32 %v310, %v322
    %v331 = vadd.f32 %v311, %v322
    %v332 = vadd.f32 %v312, %v322
    %v333 = vadd.f32 %v313, %v327
    %v334 = vadd.f32 %v314, %v327
    %v335 = vadd.f32 %v315, %v327
    %v336 = vadd.f32 %v316, %v327
    %v337 = vmax.f32 %v329, 0.0
    %v338 = vmax.f32 %v330, 0.0
    %v339 = vmax.f32 %v331, 0.0
    %v340 = vmax.f32 %v332, 0.0
    %v341 = vmax.f32 %v333, 0.0
    %v342 = vmax.f32 %v334, 0.0
    %v343 = vmax.f32 %v335, 0.0
    %v344 = vmax.f32 %v336, 0.0
    %v345 = vpack.c.bf16 %v338, %v337
    %v346 = vpack.c.bf16 %v340, %v339
    %v347 = vpack.c.bf16 %v342, %v341
    %v348 = vpack.c.bf16 %v344, %v343
    %349 = vst [vmem:[%s3] sm:$0xff] %v345
    %350 = vst [vmem:[%s3 + $0x8] sm:$0xff] %v346
    %351 = vst [vmem:[%s3 + $0x10] sm:$0xff] %v347
    %352 = vst [vmem:[%s3 + $0x18] sm:$0xff] %v348
  $region21: #{polyconv_forward.1} parent=0 // pred_fallthru
    _
  // Predicated region
  $region22: #{polyconv_forward.1} parent=0 // pred_check
    _
  $region23: #{polyconv_forward.1} parent=0 // pred_check_branch
    %354 = sbr.rel (0) target = $region25
  $region24: #{polyconv_forward.1} parent=0 // pred_region
    _
  $region25: #{polyconv_forward.1} parent=0 // pred_fallthru
    _
  // Predicated region
  $region26: #{polyconv_forward.1} parent=0 // pred_check
    _
  $region27: #{polyconv_forward.1} parent=0 // pred_check_branch
    %356 = sbr.rel (0) target = $region29
  $region28: #{polyconv_forward.1} parent=0 // pred_region
    _
  $region29: #{polyconv_forward.1} parent=0 // pred_fallthru
    _

</llo_original>
